<compile_context>
chip_gen: v5e
topology: v5e:2x2
jax: 0.10.0
libtpu: 0.0.40
codegen_flags: <defaults>
</compile_context>

<pallas_src>
import functools

import jax
import jax.numpy as jnp
from jax.experimental import pallas as pl
from jax.experimental.pallas import tpu as pltpu

_LANE = 128
_SUBLANE = 8


def _bfl_kernel(prob_ref, tgt_ref, acc_ref, *, alpha0, alpha1, gamma, smooth,
                m_rows, tile_rows, tiles_per_split):
    """One (tile_rows, 128) tile: elementwise focal terms + lane-dense partial sums."""
    s = pl.program_id(0)          # parallel split (dual-TC sharding on v7x)
    i = pl.program_id(1)          # sequential reduction step within the split

    @pl.when(i == 0)
    def _():
        acc_ref[...] = jnp.zeros_like(acc_ref)

    x = prob_ref[...].astype(jnp.float32)          # (TR, 128)
    t = tgt_ref[...]                               # (TR, 128) float32

    tr, lane = x.shape

    # Rows >= m_rows only exist in the (Pallas-padded) edge tile or in clamped
    # out-of-range splits; their contents are undefined, so mask them.
    row0 = (s * tiles_per_split + i) * tile_rows
    rows = row0 + jax.lax.broadcasted_iota(jnp.int32, (tr, lane), 0)
    valid = rows < m_rows

    pos = jnp.where(valid & (t == 1.0), 1.0, 0.0)
    neg = jnp.where(valid & (t == 0.0), 1.0, 0.0)

    p = jnp.where(valid, x, 0.5)                   # keep log() finite on junk rows
    p = jnp.clip(p, smooth, 1.0 - smooth)
    one_m_p = 1.0 - p
    log_p = jnp.log(p)
    log_1mp = jnp.log(one_m_p)

    if float(gamma) == 2.0:                        # avoid generic pow (exp+log on EUP)
        w_pos = one_m_p * one_m_p
        w_neg = p * p
    else:
        w_pos = one_m_p ** gamma
        w_neg = p ** gamma

    pos_loss = (-alpha0) * w_pos * log_p * pos
    neg_loss = (-alpha1) * w_neg * log_1mp * neg

    def fold(v):                                    # (TR,128) -> (8,128), VPU vreg adds
        return v.reshape(tr // _SUBLANE, _SUBLANE, lane).sum(axis=0)

    acc_ref[0, 0:8, :] = acc_ref[0, 0:8, :] + fold(pos_loss)
    acc_ref[0, 8:16, :] = acc_ref[0, 8:16, :] + fold(neg_loss)
    acc_ref[0, 16:24, :] = acc_ref[0, 16:24, :] + fold(pos)
    acc_ref[0, 24:32, :] = acc_ref[0, 24:32, :] + fold(neg)


def binary_focal_loss(output, target, *, alpha=(1.0, 1.0), gamma=2,
                      ignore_index=None, reduction='mean', smooth=1e-6,
                      tile_rows=4096, num_splits=2):
    """output: probabilities (any shape); target: {0,1} labels of the same shape."""
    assert reduction in ('none', 'mean', 'sum')
    # NOTE: like the PyTorch module, `reduction` and `ignore_index` are not used
    # by the forward computation.
    if isinstance(alpha, (float, int)):
        a0, a1 = float(alpha), 1.0 - float(alpha)
    else:
        a = list(alpha)
        assert len(a) == 2, 'the `alpha` shape is not match the number of class'
        a0, a1 = float(a[0]), float(a[1])

    prob = output.reshape(-1)
    if not jnp.issubdtype(prob.dtype, jnp.floating):
        prob = prob.astype(jnp.float32)
    tgt = target.reshape(-1).astype(jnp.float32)
    p_total = prob.shape[0]

    # Lane-dense (M, 128) view built from whole (8,128) vregs. Only pad when the
    # element count is not already a multiple of 1024 (sentinel target = 2.0 is
    # neither pos nor neg; prob = 0.5 keeps log() finite -> exact zero contribution).
    chunk = _LANE * _SUBLANE
    rem = p_total % chunk
    if rem:
        pad = chunk - rem
        prob = jnp.pad(prob, (0, pad), constant_values=0.5)
        tgt = jnp.pad(tgt, (0, pad), constant_values=2.0)
    m_rows = prob.shape[0] // _LANE
    prob2 = prob.reshape(m_rows, _LANE)
    tgt2 = tgt.reshape(m_rows, _LANE)

    assert tile_rows % _SUBLANE == 0
    tr = min(tile_rows, m_rows)                    # m_rows is a multiple of 8
    tiles_total = pl.cdiv(m_rows, tr)
    nsplit = max(1, min(num_splits, tiles_total))
    tps = pl.cdiv(tiles_total, nsplit)

    def in_map(s, i):
        # clamp so duplicated (out-of-range) steps read an in-bounds tile; the
        # in-kernel `rows < m_rows` mask zeroes their contribution.
        return (jnp.minimum(s * tps + i, tiles_total - 1), 0)

    acc = pl.pallas_call(
        functools.partial(_bfl_kernel, alpha0=a0, alpha1=a1, gamma=gamma,
                          smooth=smooth, m_rows=m_rows, tile_rows=tr,
                          tiles_per_split=tps),
        out_shape=jax.ShapeDtypeStruct((nsplit, 4 * _SUBLANE, _LANE), jnp.float32),
        grid_spec=pltpu.PrefetchScalarGridSpec(
            num_scalar_prefetch=0,
            grid=(nsplit, tps),
            in_specs=[
                pl.BlockSpec((tr, _LANE), in_map),     # probabilities tile
                pl.BlockSpec((tr, _LANE), in_map),     # target tile
            ],
            out_specs=pl.BlockSpec((1, 4 * _SUBLANE, _LANE),
                                   lambda s, i: (s, 0, 0)),
        ),
        compiler_params=pltpu.CompilerParams(
            dimension_semantics=("parallel", "arbitrary")),
    )(prob2, tgt2)

    # Tiny final reduce + torch-style combination, outside the kernel.
    sums = jnp.sum(acc.reshape(nsplit, 4, _SUBLANE, _LANE), axis=(0, 2, 3))
    pos_loss, neg_loss, num_pos, num_neg = sums[0], sums[1], sums[2], sums[3]
    return jnp.where(num_pos == 0.0, neg_loss,
                     pos_loss / num_pos + neg_loss / num_neg)


class BinaryFocalLoss:
    """Forward-only JAX/Pallas port of the PyTorch BinaryFocalLoss module."""

    def __init__(self, alpha=(1.0, 1.0), gamma=2, ignore_index=None, reduction='mean'):
        if alpha is None:
            alpha = [0.25, 0.75]
        self.alpha = alpha
        self.gamma = gamma
        self.smooth = 1e-06
        self.ignore_index = ignore_index
        self.reduction = reduction
        assert self.reduction in ['none', 'mean', 'sum']

    def __call__(self, output, target):
        return binary_focal_loss(output, target, alpha=self.alpha, gamma=self.gamma,
                                 ignore_index=self.ignore_index,
                                 reduction=self.reduction, smooth=self.smooth)


def _reference(output, target, alpha=(1.0, 1.0), gamma=2.0, smooth=1e-6):
    """Pure-JAX mirror of the PyTorch forward."""
    prob = jnp.clip(output.astype(jnp.float32), smooth, 1.0 - smooth)
    t = target.astype(jnp.float32)
    pos_mask = (t == 1.0).astype(jnp.float32)
    neg_mask = (t == 0.0).astype(jnp.float32)
    pos_loss = (-alpha[0] * (1.0 - prob) ** gamma * jnp.log(prob) * pos_mask).sum()
    neg_loss = (-alpha[1] * prob ** gamma * jnp.log(1.0 - prob) * neg_mask).sum()
    num_pos = pos_mask.sum()
    num_neg = neg_mask.sum()
    return jnp.where(num_pos == 0, neg_loss, pos_loss / num_pos + neg_loss / num_neg)


if __name__ == "__main__":
    key = jax.random.PRNGKey(0)
    k1, k2, k3, k4 = jax.random.split(key, 4)

    # Small shapes consistent with the module: per-pixel probabilities + binary target.
    N, C, H, W = 2, 1, 16, 16
    output = jax.nn.sigmoid(jax.random.normal(k1, (N, C, H, W), dtype=jnp.float32))
    target = jax.random.bernoulli(k2, 0.3, (N, C, H, W)).astype(jnp.float32)

    crit = BinaryFocalLoss(alpha=[1.0, 1.0], gamma=2, reduction='mean')
    loss = jax.block_until_ready(crit(output, target))
    ref = _reference(output, target, alpha=(1.0, 1.0), gamma=2.0)
    assert jnp.allclose(loss, ref, rtol=1e-5, atol=1e-6), (loss, ref)

    # Second call exercising the multi-tile + 2-split (parallel axis) path.
    N2, C2, H2, W2 = 2, 1, 64, 64
    out2 = jax.nn.sigmoid(jax.random.normal(k3, (N2, C2, H2, W2), dtype=jnp.float32))
    tgt2 = jax.random.bernoulli(k4, 0.4, (N2, C2, H2, W2)).astype(jnp.float32)
    loss2 = jax.block_until_ready(
        binary_focal_loss(out2, tgt2, alpha=(0.25, 0.75), gamma=2, tile_rows=16))
    ref2 = _reference(out2, tgt2, alpha=(0.25, 0.75), gamma=2.0)
    assert jnp.allclose(loss2, ref2, rtol=1e-5, atol=1e-6), (loss2, ref2)

    print("KERNEL_OK")
</pallas_src>

<mosaic_0001>
module attributes {stable_mosaic.version = 11 : i64} {
  func.func @_bfl_kernel(%arg0: i32, %arg1: i32, %arg2: memref<8x128xf32, #tpu.memory_space<vmem>>, %arg3: memref<8x128xf32, #tpu.memory_space<vmem>>, %arg4: memref<1x32x128xf32, #tpu.memory_space<vmem>>) attributes {dimension_semantics = [#tpu.dimension_semantics<parallel>, #tpu.dimension_semantics<arbitrary>], iteration_bounds = array<i64: 1, 1>, scalar_prefetch = 0 : i64, scratch_operands = 0 : i64, tpu.core_type = #tpu.core_type<tc>, window_params = [{transform_indices = @transform_0, window_bounds = array<i64: 8, 128>}, {transform_indices = @transform_1, window_bounds = array<i64: 8, 128>}, {transform_indices = @transform_2, window_bounds = array<i64: 1, 32, 128>}]} {
    %c0_i32 = arith.constant 0 : i32
    %0 = arith.cmpi eq, %arg1, %c0_i32 : i32
    %1 = arith.extui %0 : i1 to i32
    %c0_i32_0 = arith.constant 0 : i32
    %2 = arith.cmpi ne, %1, %c0_i32_0 : i32
    scf.if %2 {
      %cst_41 = arith.constant 0.000000e+00 : f32
      %77 = vector.broadcast %cst_41 : f32 to vector<1x32x128xf32>
      %c0_42 = arith.constant 0 : index
      %c0_43 = arith.constant 0 : index
      %c0_44 = arith.constant 0 : index
      %78 = vector.load %arg4[%c0_42, %c0_43, %c0_44] : memref<1x32x128xf32, #tpu.memory_space<vmem>>, vector<1x32x128xf32>
      tpu.vector_store %arg4[%c0_42, %c0_43, %c0_44], %77 {strides = array<i32>} : memref<1x32x128xf32, #tpu.memory_space<vmem>>, vector<1x32x128xf32>,
    } else {
    }
    %c0 = arith.constant 0 : index
    %c0_1 = arith.constant 0 : index
    %3 = vector.load %arg2[%c0, %c0_1] : memref<8x128xf32, #tpu.memory_space<vmem>>, vector<8x128xf32>
    %c0_2 = arith.constant 0 : index
    %c0_3 = arith.constant 0 : index
    %4 = vector.load %arg3[%c0_2, %c0_3] : memref<8x128xf32, #tpu.memory_space<vmem>>, vector<8x128xf32>
    %c1_i32 = arith.constant 1 : i32
    %5 = arith.muli %arg0, %c1_i32 : i32
    %6 = arith.addi %5, %arg1 : i32
    %c8_i32 = arith.constant 8 : i32
    %7 = arith.muli %6, %c8_i32 : i32
    %8 = tpu.iota {dimensions = array<i32: 0>} : vector<8x128xi32>
    %9 = vector.broadcast %7 : i32 to vector<8x128xi32>
    %10 = arith.addi %9, %8 : vector<8x128xi32>
    %c8_i32_4 = arith.constant 8 : i32
    %11 = vector.broadcast %c8_i32_4 : i32 to vector<8x128xi32>
    %12 = arith.cmpi slt, %10, %11 : vector<8x128xi32>
    %cst = arith.constant 1.000000e+00 : f32
    %13 = vector.broadcast %cst : f32 to vector<8x128xf32>
    %14 = arith.cmpf oeq, %4, %13 : vector<8x128xf32>
    %15 = arith.andi %12, %14 : vector<8x128xi1>
    %cst_5 = arith.constant 1.000000e+00 : f32
    %cst_6 = arith.constant 0.000000e+00 : f32
    %16 = vector.broadcast %cst_5 : f32 to vector<8x128xf32>
    %17 = vector.broadcast %cst_6 : f32 to vector<8x128xf32>
    %18 = arith.select %15, %16, %17 : vector<8x128xi1>, vector<8x128xf32>
    %cst_7 = arith.constant 0.000000e+00 : f32
    %19 = vector.broadcast %cst_7 : f32 to vector<8x128xf32>
    %20 = arith.cmpf oeq, %4, %19 : vector<8x128xf32>
    %21 = arith.andi %12, %20 : vector<8x128xi1>
    %cst_8 = arith.constant 1.000000e+00 : f32
    %cst_9 = arith.constant 0.000000e+00 : f32
    %22 = vector.broadcast %cst_8 : f32 to vector<8x128xf32>
    %23 = vector.broadcast %cst_9 : f32 to vector<8x128xf32>
    %24 = arith.select %21, %22, %23 : vector<8x128xi1>, vector<8x128xf32>
    %cst_10 = arith.constant 5.000000e-01 : f32
    %25 = vector.broadcast %cst_10 : f32 to vector<8x128xf32>
    %26 = arith.select %12, %3, %25 : vector<8x128xi1>, vector<8x128xf32>
    %cst_11 = arith.constant 9.99999997E-7 : f32
    %cst_12 = arith.constant 0.999998986 : f32
    %27 = vector.broadcast %cst_11 : f32 to vector<8x128xf32>
    %28 = arith.maximumf %27, %26 : vector<8x128xf32>
    %29 = vector.broadcast %cst_12 : f32 to vector<8x128xf32>
    %30 = arith.minimumf %29, %28 : vector<8x128xf32>
    %cst_13 = arith.constant 1.000000e+00 : f32
    %31 = vector.broadcast %cst_13 : f32 to vector<8x128xf32>
    %32 = arith.subf %31, %30 : vector<8x128xf32>
    %33 = math.log %30 : vector<8x128xf32>
    %34 = math.log %32 : vector<8x128xf32>
    %35 = arith.mulf %32, %32 : vector<8x128xf32>
    %36 = arith.mulf %30, %30 : vector<8x128xf32>
    %cst_14 = arith.constant -1.000000e+00 : f32
    %37 = vector.broadcast %cst_14 : f32 to vector<8x128xf32>
    %38 = arith.mulf %37, %35 : vector<8x128xf32>
    %39 = arith.mulf %38, %33 : vector<8x128xf32>
    %40 = arith.mulf %39, %18 : vector<8x128xf32>
    %cst_15 = arith.constant -1.000000e+00 : f32
    %41 = vector.broadcast %cst_15 : f32 to vector<8x128xf32>
    %42 = arith.mulf %41, %36 : vector<8x128xf32>
    %43 = arith.mulf %42, %34 : vector<8x128xf32>
    %44 = arith.mulf %43, %24 : vector<8x128xf32>
    %c0_16 = arith.constant 0 : index
    %c0_17 = arith.constant 0 : index
    %c0_18 = arith.constant 0 : index
    %45 = vector.load %arg4[%c0_16, %c0_17, %c0_18] : memref<1x32x128xf32, #tpu.memory_space<vmem>>, vector<1x8x128xf32>
    %46 = vector.shape_cast %45 : vector<1x8x128xf32> to vector<8x128xf32>
    %47 = vector.shape_cast %40 : vector<8x128xf32> to vector<1x8x128xf32>
    %cst_19 = arith.constant dense<0.000000e+00> : vector<8x128xf32>
    %48 = vector.multi_reduction <add>, %47, %cst_19 [0] : vector<1x8x128xf32> to vector<8x128xf32>
    %49 = arith.addf %46, %48 : vector<8x128xf32>
    %c0_20 = arith.constant 0 : index
    %c0_21 = arith.constant 0 : index
    %c0_22 = arith.constant 0 : index
    %50 = vector.load %arg4[%c0_20, %c0_21, %c0_22] : memref<1x32x128xf32, #tpu.memory_space<vmem>>, vector<1x8x128xf32>
    %51 = vector.shape_cast %50 : vector<1x8x128xf32> to vector<8x128xf32>
    %52 = vector.shape_cast %49 : vector<8x128xf32> to vector<1x8x128xf32>
    tpu.vector_store %arg4[%c0_20, %c0_21, %c0_22], %52 {strides = array<i32>} : memref<1x32x128xf32, #tpu.memory_space<vmem>>, vector<1x8x128xf32>,
    %c0_23 = arith.constant 0 : index
    %c8 = arith.constant 8 : index
    %c0_24 = arith.constant 0 : index
    %53 = vector.load %arg4[%c0_23, %c8, %c0_24] : memref<1x32x128xf32, #tpu.memory_space<vmem>>, vector<1x8x128xf32>
    %54 = vector.shape_cast %53 : vector<1x8x128xf32> to vector<8x128xf32>
    %55 = vector.shape_cast %44 : vector<8x128xf32> to vector<1x8x128xf32>
    %cst_25 = arith.constant dense<0.000000e+00> : vector<8x128xf32>
    %56 = vector.multi_reduction <add>, %55, %cst_25 [0] : vector<1x8x128xf32> to vector<8x128xf32>
    %57 = arith.addf %54, %56 : vector<8x128xf32>
    %c0_26 = arith.constant 0 : index
    %c8_27 = arith.constant 8 : index
    %c0_28 = arith.constant 0 : index
    %58 = vector.load %arg4[%c0_26, %c8_27, %c0_28] : memref<1x32x128xf32, #tpu.memory_space<vmem>>, vector<1x8x128xf32>
    %59 = vector.shape_cast %58 : vector<1x8x128xf32> to vector<8x128xf32>
    %60 = vector.shape_cast %57 : vector<8x128xf32> to vector<1x8x128xf32>
    tpu.vector_store %arg4[%c0_26, %c8_27, %c0_28], %60 {strides = array<i32>} : memref<1x32x128xf32, #tpu.memory_space<vmem>>, vector<1x8x128xf32>,
    %c0_29 = arith.constant 0 : index
    %c16 = arith.constant 16 : index
    %c0_30 = arith.constant 0 : index
    %61 = vector.load %arg4[%c0_29, %c16, %c0_30] : memref<1x32x128xf32, #tpu.memory_space<vmem>>, vector<1x8x128xf32>
    %62 = vector.shape_cast %61 : vector<1x8x128xf32> to vector<8x128xf32>
    %63 = vector.shape_cast %18 : vector<8x128xf32> to vector<1x8x128xf32>
    %cst_31 = arith.constant dense<0.000000e+00> : vector<8x128xf32>
    %64 = vector.multi_reduction <add>, %63, %cst_31 [0] : vector<1x8x128xf32> to vector<8x128xf32>
    %65 = arith.addf %62, %64 : vector<8x128xf32>
    %c0_32 = arith.constant 0 : index
    %c16_33 = arith.constant 16 : index
    %c0_34 = arith.constant 0 : index
    %66 = vector.load %arg4[%c0_32, %c16_33, %c0_34] : memref<1x32x128xf32, #tpu.memory_space<vmem>>, vector<1x8x128xf32>
    %67 = vector.shape_cast %66 : vector<1x8x128xf32> to vector<8x128xf32>
    %68 = vector.shape_cast %65 : vector<8x128xf32> to vector<1x8x128xf32>
    tpu.vector_store %arg4[%c0_32, %c16_33, %c0_34], %68 {strides = array<i32>} : memref<1x32x128xf32, #tpu.memory_space<vmem>>, vector<1x8x128xf32>,
    %c0_35 = arith.constant 0 : index
    %c24 = arith.constant 24 : index
    %c0_36 = arith.constant 0 : index
    %69 = vector.load %arg4[%c0_35, %c24, %c0_36] : memref<1x32x128xf32, #tpu.memory_space<vmem>>, vector<1x8x128xf32>
    %70 = vector.shape_cast %69 : vector<1x8x128xf32> to vector<8x128xf32>
    %71 = vector.shape_cast %24 : vector<8x128xf32> to vector<1x8x128xf32>
    %cst_37 = arith.constant dense<0.000000e+00> : vector<8x128xf32>
    %72 = vector.multi_reduction <add>, %71, %cst_37 [0] : vector<1x8x128xf32> to vector<8x128xf32>
    %73 = arith.addf %70, %72 : vector<8x128xf32>
    %c0_38 = arith.constant 0 : index
    %c24_39 = arith.constant 24 : index
    %c0_40 = arith.constant 0 : index
    %74 = vector.load %arg4[%c0_38, %c24_39, %c0_40] : memref<1x32x128xf32, #tpu.memory_space<vmem>>, vector<1x8x128xf32>
    %75 = vector.shape_cast %74 : vector<1x8x128xf32> to vector<8x128xf32>
    %76 = vector.shape_cast %73 : vector<8x128xf32> to vector<1x8x128xf32>
    tpu.vector_store %arg4[%c0_38, %c24_39, %c0_40], %76 {strides = array<i32>} : memref<1x32x128xf32, #tpu.memory_space<vmem>>, vector<1x8x128xf32>,
    return
  }
  func.func @transform_0(%arg0: i32, %arg1: i32) -> (i32, i32) {
    %c1_i32 = arith.constant 1 : i32
    %0 = arith.muli %arg0, %c1_i32 : i32
    %1 = arith.addi %0, %arg1 : i32
    %c0_i32 = arith.constant 0 : i32
    %2 = arith.minsi %1, %c0_i32 : i32
    %c0_i32_0 = arith.constant 0 : i32
    %c0_i32_1 = arith.constant 0 : i32
    return %2, %c0_i32_0 : i32, i32
  }
  func.func @transform_1(%arg0: i32, %arg1: i32) -> (i32, i32) {
    %c1_i32 = arith.constant 1 : i32
    %0 = arith.muli %arg0, %c1_i32 : i32
    %1 = arith.addi %0, %arg1 : i32
    %c0_i32 = arith.constant 0 : i32
    %2 = arith.minsi %1, %c0_i32 : i32
    %c0_i32_0 = arith.constant 0 : i32
    %c0_i32_1 = arith.constant 0 : i32
    return %2, %c0_i32_0 : i32, i32
  }
  func.func @transform_2(%arg0: i32, %arg1: i32) -> (i32, i32, i32) {
    %c0_i32 = arith.constant 0 : i32
    %c0_i32_0 = arith.constant 0 : i32
    %c0_i32_1 = arith.constant 0 : i32
    return %arg0, %c0_i32, %c0_i32_0 : i32, i32, i32
  }
}

</mosaic_0001>

<llo_original>
// kernel: tpu_custom_call.1
$region0: #{tpu_custom_call.1}
  #allocation0 [shape = 'u32[]', space=smem, size = 0x4, offset = 0x4, fixed_abs, tag = 'smem constant byte address 0x4 - core index']
  #allocation1 [shape = 'u32[72,128]{1,0:T(1,128)}', space=vmem, size = 0x9000, scoped, tag = 'internal scratch']
  %s0 = inlined_call_operand.hbm [shape: f32[8,128], index: 0, kind: input, shape index: {}]
  %s1 = inlined_call_operand.hbm [shape: f32[8,128], index: 1, kind: input, shape index: {}]
  %s2 = inlined_call_operand.hbm [shape: f32[1,32,128], index: 2, kind: output, shape index: {}]
  %s3 = sld [smem:[#allocation0]]
  $region30: #{tpu_custom_call.1} parent=0
    _
  %s5 = ssub.s32 1, %s3
  %s6 = scalar_select 0, %s5, %s3
  $region1: #{tpu_custom_call.1} parent=0
    #allocation2 [shape = 'u8[4096]{0}', space=vmem, size = 0x1000, scoped, tag = 'input window, operand 0, single buffered']
    #allocation3 [shape = 's32[1]{0}', space=sflag, size = 0x4, scoped, tag = 'scoped memory for tpu_custom_call.1']
    #allocation4 [shape = 's32[1]{0}', space=sflag, size = 0x4, scoped, tag = 'scoped memory for tpu_custom_call.1']
    #allocation5 [shape = 'u8[4096]{0}', space=vmem, size = 0x1000, scoped, tag = 'input window, operand 1, single buffered']
    #allocation6 [shape = 's32[1]{0}', space=sflag, size = 0x4, scoped, tag = 'scoped memory for tpu_custom_call.1']
    #allocation7 [shape = 'u8[16384]{0}', space=vmem, size = 0x4000, scoped, tag = 'output window, operand 0, single buffered']
    %7 = vsyncpa [#allocation3], 0
    %8 = vsyncpa [#allocation6], 0
    %9 = vsyncpa [#allocation4], 0
    // Predicated region
    $region2: #{tpu_custom_call.1} parent=1 // pred_check
      _
    $region3: #{tpu_custom_call.1} parent=1 // pred_check_branch
      %11 = sbr.rel (0) target = $region5
    $region4: #{tpu_custom_call.1} parent=1 // pred_region
      %s12 = sadd.s32 0, 0
      %p13 = scmp.lt.s32.totalorder %s12, 0
      %s14 = scalar_select %p13, %s12, 0
      %16 = vsyncadd [#allocation3], 0
      %s17 = smul.addr %s14, 8
      %s18 = scalar_lea.hbm %s0, %s17
      %s20 = sshll.u32 %s18, 4
      %s21 = int_to_ptr.hbm [resolvable:$true] %s20
      %s22 = sshll.u32 [#allocation2], 4
      %s23 = int_to_ptr.vmem [resolvable:$true] %s22
      %25 = dma.hbm_to_vmem [thread:$0]  %s21, 128, %s23, [#allocation3]
    $region5: #{tpu_custom_call.1} parent=1 // pred_fallthru
      _
    // Predicated region
    $region6: #{tpu_custom_call.1} parent=1 // pred_check
      _
    $region7: #{tpu_custom_call.1} parent=1 // pred_check_branch
      %27 = sbr.rel (0) target = $region9
    $region8: #{tpu_custom_call.1} parent=1 // pred_region
      %s28 = sadd.s32 0, 0
      %p29 = scmp.lt.s32.totalorder %s28, 0
      %s30 = scalar_select %p29, %s28, 0
      %32 = vsyncadd [#allocation6], 0
      %s33 = smul.addr %s30, 8
      %s34 = scalar_lea.hbm %s1, %s33
      %s36 = sshll.u32 %s34, 4
      %s37 = int_to_ptr.hbm [resolvable:$true] %s36
      %s38 = sshll.u32 [#allocation5], 4
      %s39 = int_to_ptr.vmem [resolvable:$true] %s38
      %41 = dma.hbm_to_vmem [thread:$0]  %s37, 128, %s39, [#allocation6]
    $region9: #{tpu_custom_call.1} parent=1 // pred_fallthru
      _
    // Predicated region
    $region10: #{tpu_custom_call.1} parent=1 // pred_check
      _
    $region11: #{tpu_custom_call.1} parent=1 // pred_check_branch
      %43 = sbr.rel (0) target = $region13
    $region12: #{tpu_custom_call.1} parent=1 // pred_region
      %45 = dma.done [#allocation3], 128
    $region13: #{tpu_custom_call.1} parent=1 // pred_fallthru
      _
    // Predicated region
    $region14: #{tpu_custom_call.1} parent=1 // pred_check
      _
    $region15: #{tpu_custom_call.1} parent=1 // pred_check_branch
      %47 = sbr.rel (0) target = $region17
    $region16: #{tpu_custom_call.1} parent=1 // pred_region
      %49 = dma.done [#allocation6], 128
    $region17: #{tpu_custom_call.1} parent=1 // pred_fallthru
      _
    %s50 = sadd.s32 0, 0
    %p51 = scmp.lt.s32.totalorder %s50, 0
    %s52 = scalar_select %p51, %s50, 0
    %s53 = sadd.s32 0, 0
    %p54 = scmp.lt.s32.totalorder %s53, 0
    %s55 = scalar_select %p54, %s53, 0
    %p56 = scmp.eq.s32.totalorder 0, 0
    // Predicated region
    $region18: #{tpu_custom_call.1} parent=1 // pred_check
      %p57 = pneg %p56
    $region19: #{tpu_custom_call.1} parent=1 // pred_check_branch
      %59 = sbr.rel (%p57) target = $region21
    $region20: #{tpu_custom_call.1} parent=1 // pred_region
      %60 = vst [vmem:[#allocation7] sm:$0xff] 0.0
      %61 = vst [vmem:[#allocation7 + $0x8] sm:$0xff] 0.0
      %62 = vst [vmem:[#allocation7 + $0x10] sm:$0xff] 0.0
      %63 = vst [vmem:[#allocation7 + $0x18] sm:$0xff] 0.0
    $region21: #{tpu_custom_call.1} parent=1 // pred_fallthru
      _
    %v64 = vld [vmem:[#allocation2] sm:$0xff]
    %v65 = vld [vmem:[#allocation5] sm:$0xff]
    %s66 = sadd.s32 0, 0
    %s67 = smul.u32 %s66, 8
    %v68 = vlaneseq
    %v69 = vshrl.u32 %v68, 7
    %v70 = vstv %s67
    %v71 = vadd.s32 %v70, %v69
    %vm72 = vcmp.lt.s32.totalorder %v71, 8
    %vm73 = vcmp.eq.f32.partialorder %v65, 1.0
    %vm74 = vmand %vm72, %vm73
    %v75 = vsel %vm74, 1.0, 0.0
    %vm76 = vcmp.eq.f32.partialorder %v65, 0.0
    %vm77 = vmand %vm72, %vm76
    %v78 = vsel %vm77, 1.0, 0.0
    %v79 = vsel %vm72, %v64, 0.5
    %v80 = vmax.f32 %v79, 1e-06
    %v81 = vmin.f32 %v80, 0.999999
    %v82 = vsub.f32 1.0, %v81
    %v83 = vlog2.pop %v81
    %v84 = vmul.f32 %v83, 0.6931472
    %v85 = vlog2.pop %v82
    %v86 = vmul.f32 %v85, 0.6931472
    %v87 = vmul.f32 %v82, %v82
    %v88 = vmul.f32 %v81, %v81
    %v89 = vmul.f32 %v87, -1.0
    %v90 = vmul.f32 %v89, %v84
    %v91 = vmul.f32 %v90, %v75
    %v92 = vmul.f32 %v88, -1.0
    %v93 = vmul.f32 %v92, %v86
    %v94 = vmul.f32 %v93, %v78
    %v95 = vld [vmem:[#allocation7] sm:$0xff]
    %v96 = vadd.f32 %v91, 0.0
    %v97 = vadd.f32 %v95, %v96
    %98 = vst [vmem:[#allocation7] sm:$0xff] %v97
    %v99 = vld [vmem:[#allocation7 + $0x8] sm:$0xff]
    %v100 = vadd.f32 %v94, 0.0
    %v101 = vadd.f32 %v99, %v100
    %102 = vst [vmem:[#allocation7 + $0x8] sm:$0xff] %v101
    %v103 = vld [vmem:[#allocation7 + $0x10] sm:$0xff]
    %v104 = vadd.f32 %v75, 0.0
    %v105 = vadd.f32 %v103, %v104
    %106 = vst [vmem:[#allocation7 + $0x10] sm:$0xff] %v105
    %v107 = vld [vmem:[#allocation7 + $0x18] sm:$0xff]
    %v108 = vadd.f32 %v78, 0.0
    %v109 = vadd.f32 %v107, %v108
    %110 = vst [vmem:[#allocation7 + $0x18] sm:$0xff] %v109
    // Predicated region
    $region22: #{tpu_custom_call.1} parent=1 // pred_check
      _
    $region23: #{tpu_custom_call.1} parent=1 // pred_check_branch
      %112 = sbr.rel (0) target = $region25
    $region24: #{tpu_custom_call.1} parent=1 // pred_region
      %114 = vsyncadd [#allocation4], 0
      %s115 = sshll.u32 [#allocation7], 4
      %s116 = int_to_ptr.vmem [resolvable:$true] %s115
      %s117 = sshll.u32 %s2, 4
      %s118 = int_to_ptr.hbm [resolvable:$true] %s117
      %123 = dma.vmem_to_hbm [thread:$0]  %s116, 512, %s118, [#allocation4], 128, 128, 8
    $region25: #{tpu_custom_call.1} parent=1 // pred_fallthru
      _
    // Predicated region
    $region26: #{tpu_custom_call.1} parent=1 // pred_check
      _
    $region27: #{tpu_custom_call.1} parent=1 // pred_check_branch
      %125 = sbr.rel (0) target = $region29
    $region28: #{tpu_custom_call.1} parent=1 // pred_region
      %127 = dma.done [#allocation4], 512
    $region29: #{tpu_custom_call.1} parent=1 // pred_fallthru
      _
    %128 = vsyncpa [#allocation3], 1
    %129 = vsyncpa [#allocation6], 1
    %130 = vsyncpa [#allocation4], 1

</llo_original>
